<compile_context>
chip_gen: v7x
topology: tpu7x:2x2x1
jax: 0.10.0
libtpu: 0.0.40
codegen_flags: <defaults>
</compile_context>

<pallas_src>
import functools

import jax
import jax.numpy as jnp
from jax import lax
from jax.experimental import pallas as pl
from jax.experimental.pallas import tpu as pltpu


def _round_up(x, m):
    return (x + m - 1) // m * m


# ----------------------------------------------------------------------------
# Pallas kernel: conv1(dilated) -> chomp -> ReLU -> [dropout=identity] ->
#                conv2(dilated) -> chomp -> ReLU -> [dropout=identity] ->
#                + 1x1-conv residual -> ReLU           (one batch x time tile)
# ----------------------------------------------------------------------------
def temporal_block_kernel(xh_ref, xc_ref, w1_ref, b1_ref, w2_ref, b2_ref,
                          wsub_ref, bsub_ref, out_ref, xwin_ref, y1_ref,
                          *, K, dilation, padding, tile_t):
    """Shapes seen by the kernel (C_in / C_out already padded to 128):
       xh_ref  : (1, 1, 2p, C_in)   bf16  left halo (zeros for time tile 0)
       xc_ref  : (1, 1, T,  C_in)   bf16  current time tile
       w1_ref  : (K, C_in,  C_out)  bf16  conv1 taps
       w2_ref  : (K, C_out, C_out)  bf16  conv2 taps
       wsub_ref: (C_in, C_out)      bf16  1x1 residual projection
       b*_ref  : (1, C_out)         f32
       out_ref : (1, 1, T, C_out)   f32
       xwin_ref: (HP + T, C_in)     bf16  VMEM scratch, contiguous causal window
       y1_ref  : (T + p, C_out)     bf16  VMEM scratch, conv1 output (+ halo)
    """
    p, d, T = padding, dilation, tile_t
    HP = _round_up(2 * p, 8)        # 8-aligned slot so the big store is aligned
    B = HP - 2 * p                  # first used row of xwin_ref

    # Assemble the (T + 2p)-row causal input window in VMEM:
    #   rows [B, B+2p)   left halo (p of conv1's zero padding + p for conv2)
    #   rows [HP, HP+T)  current tile (sublane-aligned store)
    xwin_ref[B:B + 2 * p, :] = xh_ref[0, 0, :, :]
    xwin_ref[HP:HP + T, :] = xc_ref[0, 0, :, :]

    # ---- conv1 (dilated, causal) + Chomp1d(p) + ReLU over T + p rows --------
    # (the extra p leading rows are the y1 halo conv2's receptive field needs).
    # One MXU matmul per tap; bf16 operands, f32 accumulation.
    acc1 = jnp.dot(xwin_ref[B:B + T + p, :], w1_ref[0],
                   preferred_element_type=jnp.float32)
    for k in range(1, K):
        acc1 = acc1 + jnp.dot(xwin_ref[B + k * d:B + k * d + T + p, :],
                              w1_ref[k], preferred_element_type=jnp.float32)
    y1_ref[...] = jnp.maximum(acc1 + b1_ref[...], 0.0).astype(y1_ref.dtype)
    # TODO(synk): nn.Dropout has no deterministic forward; identity (inference).

    # y1 rows with global time index < 0 are conv2's zero padding, not
    # ReLU(b1); only the first time tile has such rows.
    @pl.when(pl.program_id(1) == 0)
    def _():
        y1_ref[0:p, :] = jnp.zeros((p, y1_ref.shape[-1]), y1_ref.dtype)

    # ---- conv2 (dilated, causal) + Chomp1d(p) + ReLU -------------------------
    acc2 = jnp.dot(y1_ref[0:T, :], w2_ref[0],
                   preferred_element_type=jnp.float32)
    for k in range(1, K):
        acc2 = acc2 + jnp.dot(y1_ref[k * d:k * d + T, :], w2_ref[k],
                              preferred_element_type=jnp.float32)
    y2 = jnp.maximum(acc2 + b2_ref[...], 0.0)

    # ---- residual 1x1 conv on the un-padded input rows + final ReLU ---------
    res = jnp.dot(xc_ref[0, 0, :, :], wsub_ref[...],
                  preferred_element_type=jnp.float32) + bsub_ref[...]
    out_ref[0, 0, :, :] = jnp.maximum(y2 + res, 0.0).astype(out_ref.dtype)


# ----------------------------------------------------------------------------
# Wrapper: layout plumbing + pallas_call with a (batch, time-tile) grid
# ----------------------------------------------------------------------------
def temporal_block(x_ncl, w1, b1, w2, b2, wsub, bsub,
                   *, kernel_size, dilation, padding, tile_t=512):
    """x_ncl: (N, C_in, L).  w1: (K, C_in, C_out), w2: (K, C_out, C_out),
    wsub: (C_in, C_out); biases: (C_out,).  Returns (N, C_out, L) f32."""
    N, C_in, L = x_ncl.shape
    C_out = w1.shape[-1]
    K, p, d = kernel_size, padding, dilation
    # Residual add requires chomped conv output length == L.
    assert p == d * (K - 1), "need padding == dilation*(kernel_size-1)"
    assert p >= 1

    LANE = 128
    Cpi = _round_up(C_in, LANE)     # lane-dense loads, full MXU columns
    Cpo = _round_up(C_out, LANE)    # lane-dense (unmasked) output stores

    T = min(tile_t, L)
    assert 2 * p <= T, "tile_t must be >= 2*padding (raise tile_t)"
    # TODO(synk): for very high dilation (2p ~ T) a carried-state variant with
    # an "arbitrary" time axis would avoid the duplicated-halo work.
    n_tiles = pl.cdiv(L, T)
    L_pad = n_tiles * T
    HP = _round_up(2 * p, 8)

    # NCL -> NLC bf16, pad channels to a lane multiple, right-pad time to a
    # tile multiple (sliced off after the kernel).
    x_nlc = jnp.transpose(x_ncl, (0, 2, 1)).astype(jnp.bfloat16)
    x_nlc = jnp.pad(x_nlc, ((0, 0), (0, L_pad - L), (0, Cpi - C_in)))
    x_cur = x_nlc.reshape(N, n_tiles, T, Cpi)
    # Tiny per-tile left halo (2p rows): last 2p rows of the previous tile,
    # zeros for tile 0 (conv1's causal zero padding).  ~2p/T of one input pass.
    x_halo = jnp.concatenate(
        [jnp.zeros((N, 1, 2 * p, Cpi), jnp.bfloat16),
         x_cur[:, :n_tiles - 1, T - 2 * p:, :]], axis=1)

    # Channel-padded bf16 weights, f32 biases.
    w1p = jnp.pad(w1.astype(jnp.bfloat16),
                  ((0, 0), (0, Cpi - C_in), (0, Cpo - C_out)))
    w2p = jnp.pad(w2.astype(jnp.bfloat16),
                  ((0, 0), (0, Cpo - C_out), (0, Cpo - C_out)))
    wsp = jnp.pad(wsub.astype(jnp.bfloat16),
                  ((0, Cpi - C_in), (0, Cpo - C_out)))
    b1p = jnp.pad(b1.astype(jnp.float32), (0, Cpo - C_out)).reshape(1, Cpo)
    b2p = jnp.pad(b2.astype(jnp.float32), (0, Cpo - C_out)).reshape(1, Cpo)
    bsp = jnp.pad(bsub.astype(jnp.float32), (0, Cpo - C_out)).reshape(1, Cpo)

    kern = functools.partial(temporal_block_kernel,
                             K=K, dilation=d, padding=p, tile_t=T)

    c2 = lambda n, t: (0, 0)          # resident weights/biases, no re-DMA
    c3 = lambda n, t: (0, 0, 0)

    # VMEM budget (double-buffered blocks + resident scratch) with headroom,
    # clamped to a value valid on v5e/v6e (128 MiB) and v7x (64 MiB) parts.
    blk_bytes = (2 * (2 * p + T) * Cpi * 2                              # inputs
                 + 2 * (K * Cpi * Cpo + K * Cpo * Cpo + Cpi * Cpo) * 2  # weights
                 + 2 * 3 * Cpo * 4                                      # biases
                 + 2 * T * Cpo * 4                                      # output
                 + (HP + T) * Cpi * 2 + (T + p) * Cpo * 2)              # scratch
    vmem_limit = int(min(max(2 * blk_bytes, 32 * 1024 * 1024),
                         48 * 1024 * 1024))

    flops = 2 * N * L_pad * (K * Cpi * Cpo + K * Cpo * Cpo + Cpi * Cpo)
    bytes_accessed = (2 * (x_cur.size + x_halo.size + w1p.size + w2p.size
                           + wsp.size)
                      + 4 * (3 * Cpo + N * L_pad * Cpo))

    out = pl.pallas_call(
        kern,
        out_shape=jax.ShapeDtypeStruct((N, n_tiles, T, Cpo), jnp.float32),
        grid_spec=pltpu.PrefetchScalarGridSpec(
            num_scalar_prefetch=0,
            grid=(N, n_tiles),
            in_specs=[
                pl.BlockSpec((1, 1, 2 * p, Cpi), lambda n, t: (n, t, 0, 0)),
                pl.BlockSpec((1, 1, T, Cpi), lambda n, t: (n, t, 0, 0)),
                pl.BlockSpec((K, Cpi, Cpo), c3),
                pl.BlockSpec((1, Cpo), c2),
                pl.BlockSpec((K, Cpo, Cpo), c3),
                pl.BlockSpec((1, Cpo), c2),
                pl.BlockSpec((Cpi, Cpo), c2),
                pl.BlockSpec((1, Cpo), c2),
            ],
            out_specs=pl.BlockSpec((1, 1, T, Cpo), lambda n, t: (n, t, 0, 0)),
            scratch_shapes=[
                pltpu.VMEM((HP + T, Cpi), jnp.bfloat16),
                pltpu.VMEM((T + p, Cpo), jnp.bfloat16),
            ]),
        compiler_params=pltpu.CompilerParams(
            dimension_semantics=("parallel", "parallel"),
            vmem_limit_bytes=vmem_limit),
        cost_estimate=pl.CostEstimate(flops=flops, transcendentals=0,
                                      bytes_accessed=bytes_accessed),
    )(x_halo, x_cur, w1p, b1p, w2p, b2p, wsp, bsp)

    out_nlc = out.reshape(N, L_pad, Cpo)[:, :L, :C_out]
    # NLC -> NCL to match PyTorch output layout.
    return jnp.transpose(out_nlc, (0, 2, 1))


# ----------------------------------------------------------------------------
# Parameter construction (deterministic, mirrors weight_norm reparameterization)
# ----------------------------------------------------------------------------
def weight_norm_effective(v, g):
    """v: (C_out, C_in, K), g: (C_out,). weight = g * v / ||v|| (norm over dims 1,2)."""
    norm = jnp.sqrt(jnp.sum(v * v, axis=(1, 2), keepdims=True))
    return g[:, None, None] * v / norm


def conv1d_ref(x, w_oik, b, padding, dilation):
    """Pure-JAX reference Conv1d (NCL), w_oik: (C_out, C_in, K)."""
    y = lax.conv_general_dilated(
        x, w_oik, window_strides=(1,), padding=[(padding, padding)],
        rhs_dilation=(dilation,), dimension_numbers=('NCH', 'OIH', 'NCH'))
    return y + b[None, :, None]


if __name__ == "__main__":
    # Small shapes consistent with the module.
    N, C_in, C_out, L = 2, 4, 8, 16
    K, dilation, padding = 2, 1, 1   # padding == dilation*(K-1) -> causal TCN block

    key = jax.random.PRNGKey(0)
    ks = jax.random.split(key, 8)

    x = jax.random.normal(ks[0], (N, C_in, L), jnp.float32)

    # weight_norm'd conv1: v ~ N(0, 0.01), g arbitrary deterministic positive.
    v1 = 0.01 * jax.random.normal(ks[1], (C_out, C_in, K), jnp.float32)
    g1 = 0.5 + jax.random.uniform(ks[2], (C_out,), jnp.float32)
    w1_oik = weight_norm_effective(v1, g1)
    b1 = 0.1 * jax.random.normal(ks[3], (C_out,), jnp.float32)

    v2 = 0.01 * jax.random.normal(ks[4], (C_out, C_out, K), jnp.float32)
    g2 = 0.5 + jax.random.uniform(ks[5], (C_out,), jnp.float32)
    w2_oik = weight_norm_effective(v2, g2)
    b2 = 0.1 * jax.random.normal(ks[6], (C_out,), jnp.float32)

    # sub_branch 1x1 conv (in_dim != out_dim): weight ~ N(0, 0.01) per init().
    wsub_oik = 0.01 * jax.random.normal(ks[7], (C_out, C_in, 1), jnp.float32)
    bsub = 0.05 * jnp.arange(C_out, dtype=jnp.float32)

    # Pre-round matmul operands to bf16 so the bf16-MXU kernel and the f32
    # reference see identical inputs (differences are then just accumulation).
    bf = lambda a: a.astype(jnp.bfloat16).astype(jnp.float32)
    x, w1_oik, w2_oik, wsub_oik = bf(x), bf(w1_oik), bf(w2_oik), bf(wsub_oik)

    # Kernel-layout weights: (K, C_in, C_out).
    w1_kio = jnp.transpose(w1_oik, (2, 1, 0))
    w2_kio = jnp.transpose(w2_oik, (2, 1, 0))
    wsub_io = jnp.transpose(wsub_oik[:, :, 0], (1, 0))

    # tile_t=8 on L=16 exercises both the zero-halo first tile and the
    # carried-halo second tile.
    out = temporal_block(x, w1_kio, b1, w2_kio, b2, wsub_io, bsub,
                         kernel_size=K, dilation=dilation, padding=padding,
                         tile_t=8)
    out = jax.block_until_ready(out)

    # Pure-JAX reference of the same forward pass (dropout = identity).
    y = conv1d_ref(x, w1_oik, b1, padding, dilation)[:, :, :-padding]
    y = jnp.maximum(y, 0.0)
    y = conv1d_ref(y, w2_oik, b2, padding, dilation)[:, :, :-padding]
    y = jnp.maximum(y, 0.0)
    res = conv1d_ref(x, wsub_oik, bsub, 0, 1)
    ref = jnp.maximum(y + res, 0.0)

    assert out.shape == (N, C_out, L), out.shape
    assert jnp.allclose(out, ref, rtol=1e-2, atol=1e-2), \
        float(jnp.max(jnp.abs(out - ref)))
    print("KERNEL_OK")
</pallas_src>

<mosaic_0001>
module attributes {stable_mosaic.version = 11 : i64} {
  func.func @temporal_block_kernel(%arg0: i32, %arg1: i32, %arg2: memref<1x1x2x128xbf16, #tpu.memory_space<vmem>>, %arg3: memref<1x1x8x128xbf16, #tpu.memory_space<vmem>>, %arg4: memref<2x128x128xbf16, #tpu.memory_space<vmem>>, %arg5: memref<1x128xf32, #tpu.memory_space<vmem>>, %arg6: memref<2x128x128xbf16, #tpu.memory_space<vmem>>, %arg7: memref<1x128xf32, #tpu.memory_space<vmem>>, %arg8: memref<128x128xbf16, #tpu.memory_space<vmem>>, %arg9: memref<1x128xf32, #tpu.memory_space<vmem>>, %arg10: memref<1x1x8x128xf32, #tpu.memory_space<vmem>>, %arg11: memref<16x128xbf16, #tpu.memory_space<vmem>>, %arg12: memref<9x128xbf16, #tpu.memory_space<vmem>>) attributes {dimension_semantics = [#tpu.dimension_semantics<parallel>, #tpu.dimension_semantics<parallel>], iteration_bounds = array<i64: 2, 2>, scalar_prefetch = 0 : i64, scratch_operands = 2 : i64, tpu.core_type = #tpu.core_type<tc>, window_params = [{transform_indices = @transform_0, window_bounds = array<i64: 1, 1, 2, 128>}, {transform_indices = @transform_1, window_bounds = array<i64: 1, 1, 8, 128>}, {pipeline_mode = #tpu.pipeline_mode<synchronous>, transform_indices = @transform_2, window_bounds = array<i64: 2, 128, 128>}, {pipeline_mode = #tpu.pipeline_mode<synchronous>, transform_indices = @transform_3, window_bounds = array<i64: 1, 128>}, {pipeline_mode = #tpu.pipeline_mode<synchronous>, transform_indices = @transform_4, window_bounds = array<i64: 2, 128, 128>}, {pipeline_mode = #tpu.pipeline_mode<synchronous>, transform_indices = @transform_5, window_bounds = array<i64: 1, 128>}, {pipeline_mode = #tpu.pipeline_mode<synchronous>, transform_indices = @transform_6, window_bounds = array<i64: 128, 128>}, {pipeline_mode = #tpu.pipeline_mode<synchronous>, transform_indices = @transform_7, window_bounds = array<i64: 1, 128>}, {transform_indices = @transform_8, window_bounds = array<i64: 1, 1, 8, 128>}]} {
    %c0 = arith.constant 0 : index
    %c0_0 = arith.constant 0 : index
    %c0_1 = arith.constant 0 : index
    %c0_2 = arith.constant 0 : index
    %0 = vector.load %arg2[%c0, %c0_0, %c0_1, %c0_2] : memref<1x1x2x128xbf16, #tpu.memory_space<vmem>>, vector<1x1x2x128xbf16>
    %1 = vector.shape_cast %0 : vector<1x1x2x128xbf16> to vector<2x128xbf16>
    %c6 = arith.constant 6 : index
    %c0_3 = arith.constant 0 : index
    %2 = vector.load %arg11[%c6, %c0_3] : memref<16x128xbf16, #tpu.memory_space<vmem>>, vector<2x128xbf16>
    tpu.vector_store %arg11[%c6, %c0_3], %1 {strides = array<i32>} : memref<16x128xbf16, #tpu.memory_space<vmem>>, vector<2x128xbf16>,
    %c0_4 = arith.constant 0 : index
    %c0_5 = arith.constant 0 : index
    %c0_6 = arith.constant 0 : index
    %c0_7 = arith.constant 0 : index
    %3 = vector.load %arg3[%c0_4, %c0_5, %c0_6, %c0_7] : memref<1x1x8x128xbf16, #tpu.memory_space<vmem>>, vector<1x1x8x128xbf16>
    %4 = vector.shape_cast %3 : vector<1x1x8x128xbf16> to vector<8x128xbf16>
    %c8 = arith.constant 8 : index
    %c0_8 = arith.constant 0 : index
    %5 = vector.load %arg11[%c8, %c0_8] : memref<16x128xbf16, #tpu.memory_space<vmem>>, vector<8x128xbf16>
    tpu.vector_store %arg11[%c8, %c0_8], %4 {strides = array<i32>} : memref<16x128xbf16, #tpu.memory_space<vmem>>, vector<8x128xbf16>,
    %c6_9 = arith.constant 6 : index
    %c0_10 = arith.constant 0 : index
    %6 = vector.load %arg11[%c6_9, %c0_10] : memref<16x128xbf16, #tpu.memory_space<vmem>>, vector<9x128xbf16>
    %c0_11 = arith.constant 0 : index
    %c0_12 = arith.constant 0 : index
    %c0_13 = arith.constant 0 : index
    %7 = vector.load %arg4[%c0_11, %c0_12, %c0_13] : memref<2x128x128xbf16, #tpu.memory_space<vmem>>, vector<1x128x128xbf16>
    %8 = vector.shape_cast %7 : vector<1x128x128xbf16> to vector<128x128xbf16>
    %cst = arith.constant dense<0.000000e+00> : vector<9x128xf32>
    %9 = tpu.matmul %6, %8, %cst {dimension_numbers = #tpu.dot_dimension_numbers<[1], [0], [0], [1], [0, 0, 1, 1], [], []>} : vector<9x128xbf16>, vector<128x128xbf16>, vector<9x128xf32> -> vector<9x128xf32>
    %c7 = arith.constant 7 : index
    %c0_14 = arith.constant 0 : index
    %10 = vector.load %arg11[%c7, %c0_14] : memref<16x128xbf16, #tpu.memory_space<vmem>>, vector<9x128xbf16>
    %c1 = arith.constant 1 : index
    %c0_15 = arith.constant 0 : index
    %c0_16 = arith.constant 0 : index
    %11 = vector.load %arg4[%c1, %c0_15, %c0_16] : memref<2x128x128xbf16, #tpu.memory_space<vmem>>, vector<1x128x128xbf16>
    %12 = vector.shape_cast %11 : vector<1x128x128xbf16> to vector<128x128xbf16>
    %cst_17 = arith.constant dense<0.000000e+00> : vector<9x128xf32>
    %13 = tpu.matmul %10, %12, %cst_17 {dimension_numbers = #tpu.dot_dimension_numbers<[1], [0], [0], [1], [0, 0, 1, 1], [], []>} : vector<9x128xbf16>, vector<128x128xbf16>, vector<9x128xf32> -> vector<9x128xf32>
    %14 = arith.addf %9, %13 : vector<9x128xf32>
    %c0_18 = arith.constant 0 : index
    %c0_19 = arith.constant 0 : index
    %15 = vector.load %arg5[%c0_18, %c0_19] : memref<1x128xf32, #tpu.memory_space<vmem>>, vector<1x128xf32>
    %16 = vector.broadcast %15 : vector<1x128xf32> to vector<9x128xf32>
    %17 = arith.addf %14, %16 : vector<9x128xf32>
    %cst_20 = arith.constant 0.000000e+00 : f32
    %18 = vector.broadcast %cst_20 : f32 to vector<9x128xf32>
    %19 = arith.maximumf %17, %18 : vector<9x128xf32>
    %20 = arith.truncf %19 : vector<9x128xf32> to vector<9x128xbf16>
    %c0_21 = arith.constant 0 : index
    %c0_22 = arith.constant 0 : index
    %21 = vector.load %arg12[%c0_21, %c0_22] : memref<9x128xbf16, #tpu.memory_space<vmem>>, vector<9x128xbf16>
    tpu.vector_store %arg12[%c0_21, %c0_22], %20 {strides = array<i32>} : memref<9x128xbf16, #tpu.memory_space<vmem>>, vector<9x128xbf16>,
    %c0_i32 = arith.constant 0 : i32
    %22 = arith.cmpi eq, %arg1, %c0_i32 : i32
    %23 = arith.extui %22 : i1 to i32
    %c0_i32_23 = arith.constant 0 : i32
    %24 = arith.cmpi ne, %23, %c0_i32_23 : i32
    scf.if %24 {
      %cst_53 = arith.constant 0.000000e+00 : bf16
      %52 = vector.broadcast %cst_53 : bf16 to vector<1x128xbf16>
      %c0_54 = arith.constant 0 : index
      %c0_55 = arith.constant 0 : index
      %53 = vector.load %arg12[%c0_54, %c0_55] : memref<9x128xbf16, #tpu.memory_space<vmem>>, vector<1x128xbf16>
      tpu.vector_store %arg12[%c0_54, %c0_55], %52 {strides = array<i32>} : memref<9x128xbf16, #tpu.memory_space<vmem>>, vector<1x128xbf16>,
    } else {
    }
    %c0_24 = arith.constant 0 : index
    %c0_25 = arith.constant 0 : index
    %25 = vector.load %arg12[%c0_24, %c0_25] : memref<9x128xbf16, #tpu.memory_space<vmem>>, vector<8x128xbf16>
    %c0_26 = arith.constant 0 : index
    %c0_27 = arith.constant 0 : index
    %c0_28 = arith.constant 0 : index
    %26 = vector.load %arg6[%c0_26, %c0_27, %c0_28] : memref<2x128x128xbf16, #tpu.memory_space<vmem>>, vector<1x128x128xbf16>
    %27 = vector.shape_cast %26 : vector<1x128x128xbf16> to vector<128x128xbf16>
    %cst_29 = arith.constant dense<0.000000e+00> : vector<8x128xf32>
    %28 = tpu.matmul %25, %27, %cst_29 {dimension_numbers = #tpu.dot_dimension_numbers<[1], [0], [0], [1], [0, 0, 1, 1], [], []>} : vector<8x128xbf16>, vector<128x128xbf16>, vector<8x128xf32> -> vector<8x128xf32>
    %c1_30 = arith.constant 1 : index
    %c0_31 = arith.constant 0 : index
    %29 = vector.load %arg12[%c1_30, %c0_31] : memref<9x128xbf16, #tpu.memory_space<vmem>>, vector<8x128xbf16>
    %c1_32 = arith.constant 1 : index
    %c0_33 = arith.constant 0 : index
    %c0_34 = arith.constant 0 : index
    %30 = vector.load %arg6[%c1_32, %c0_33, %c0_34] : memref<2x128x128xbf16, #tpu.memory_space<vmem>>, vector<1x128x128xbf16>
    %31 = vector.shape_cast %30 : vector<1x128x128xbf16> to vector<128x128xbf16>
    %cst_35 = arith.constant dense<0.000000e+00> : vector<8x128xf32>
    %32 = tpu.matmul %29, %31, %cst_35 {dimension_numbers = #tpu.dot_dimension_numbers<[1], [0], [0], [1], [0, 0, 1, 1], [], []>} : vector<8x128xbf16>, vector<128x128xbf16>, vector<8x128xf32> -> vector<8x128xf32>
    %33 = arith.addf %28, %32 : vector<8x128xf32>
    %c0_36 = arith.constant 0 : index
    %c0_37 = arith.constant 0 : index
    %34 = vector.load %arg7[%c0_36, %c0_37] : memref<1x128xf32, #tpu.memory_space<vmem>>, vector<1x128xf32>
    %35 = vector.broadcast %34 : vector<1x128xf32> to vector<8x128xf32>
    %36 = arith.addf %33, %35 : vector<8x128xf32>
    %cst_38 = arith.constant 0.000000e+00 : f32
    %37 = vector.broadcast %cst_38 : f32 to vector<8x128xf32>
    %38 = arith.maximumf %36, %37 : vector<8x128xf32>
    %c0_39 = arith.constant 0 : index
    %c0_40 = arith.constant 0 : index
    %c0_41 = arith.constant 0 : index
    %c0_42 = arith.constant 0 : index
    %39 = vector.load %arg3[%c0_39, %c0_40, %c0_41, %c0_42] : memref<1x1x8x128xbf16, #tpu.memory_space<vmem>>, vector<1x1x8x128xbf16>
    %40 = vector.shape_cast %39 : vector<1x1x8x128xbf16> to vector<8x128xbf16>
    %c0_43 = arith.constant 0 : index
    %c0_44 = arith.constant 0 : index
    %41 = vector.load %arg8[%c0_43, %c0_44] : memref<128x128xbf16, #tpu.memory_space<vmem>>, vector<128x128xbf16>
    %cst_45 = arith.constant dense<0.000000e+00> : vector<8x128xf32>
    %42 = tpu.matmul %40, %41, %cst_45 {dimension_numbers = #tpu.dot_dimension_numbers<[1], [0], [0], [1], [0, 0, 1, 1], [], []>} : vector<8x128xbf16>, vector<128x128xbf16>, vector<8x128xf32> -> vector<8x128xf32>
    %c0_46 = arith.constant 0 : index
    %c0_47 = arith.constant 0 : index
    %43 = vector.load %arg9[%c0_46, %c0_47] : memref<1x128xf32, #tpu.memory_space<vmem>>, vector<1x128xf32>
    %44 = vector.broadcast %43 : vector<1x128xf32> to vector<8x128xf32>
    %45 = arith.addf %42, %44 : vector<8x128xf32>
    %46 = arith.addf %38, %45 : vector<8x128xf32>
    %cst_48 = arith.constant 0.000000e+00 : f32
    %47 = vector.broadcast %cst_48 : f32 to vector<8x128xf32>
    %48 = arith.maximumf %46, %47 : vector<8x128xf32>
    %c0_49 = arith.constant 0 : index
    %c0_50 = arith.constant 0 : index
    %c0_51 = arith.constant 0 : index
    %c0_52 = arith.constant 0 : index
    %49 = vector.load %arg10[%c0_49, %c0_50, %c0_51, %c0_52] : memref<1x1x8x128xf32, #tpu.memory_space<vmem>>, vector<1x1x8x128xf32>
    %50 = vector.shape_cast %49 : vector<1x1x8x128xf32> to vector<8x128xf32>
    %51 = vector.shape_cast %48 : vector<8x128xf32> to vector<1x1x8x128xf32>
    tpu.vector_store %arg10[%c0_49, %c0_50, %c0_51, %c0_52], %51 {strides = array<i32>} : memref<1x1x8x128xf32, #tpu.memory_space<vmem>>, vector<1x1x8x128xf32>,
    return
  }
  func.func @transform_0(%arg0: i32, %arg1: i32) -> (i32, i32, i32, i32) {
    %c0_i32 = arith.constant 0 : i32
    %c0_i32_0 = arith.constant 0 : i32
    %c0_i32_1 = arith.constant 0 : i32
    return %arg0, %arg1, %c0_i32, %c0_i32_0 : i32, i32, i32, i32
  }
  func.func @transform_1(%arg0: i32, %arg1: i32) -> (i32, i32, i32, i32) {
    %c0_i32 = arith.constant 0 : i32
    %c0_i32_0 = arith.constant 0 : i32
    %c0_i32_1 = arith.constant 0 : i32
    return %arg0, %arg1, %c0_i32, %c0_i32_0 : i32, i32, i32, i32
  }
  func.func @transform_2(%arg0: i32, %arg1: i32) -> (i32, i32, i32) {
    %c0_i32 = arith.constant 0 : i32
    %c0_i32_0 = arith.constant 0 : i32
    %c0_i32_1 = arith.constant 0 : i32
    %c0_i32_2 = arith.constant 0 : i32
    return %c0_i32, %c0_i32_0, %c0_i32_1 : i32, i32, i32
  }
  func.func @transform_3(%arg0: i32, %arg1: i32) -> (i32, i32) {
    %c0_i32 = arith.constant 0 : i32
    %c0_i32_0 = arith.constant 0 : i32
    %c0_i32_1 = arith.constant 0 : i32
    return %c0_i32, %c0_i32_0 : i32, i32
  }
  func.func @transform_4(%arg0: i32, %arg1: i32) -> (i32, i32, i32) {
    %c0_i32 = arith.constant 0 : i32
    %c0_i32_0 = arith.constant 0 : i32
    %c0_i32_1 = arith.constant 0 : i32
    %c0_i32_2 = arith.constant 0 : i32
    return %c0_i32, %c0_i32_0, %c0_i32_1 : i32, i32, i32
  }
  func.func @transform_5(%arg0: i32, %arg1: i32) -> (i32, i32) {
    %c0_i32 = arith.constant 0 : i32
    %c0_i32_0 = arith.constant 0 : i32
    %c0_i32_1 = arith.constant 0 : i32
    return %c0_i32, %c0_i32_0 : i32, i32
  }
  func.func @transform_6(%arg0: i32, %arg1: i32) -> (i32, i32) {
    %c0_i32 = arith.constant 0 : i32
    %c0_i32_0 = arith.constant 0 : i32
    %c0_i32_1 = arith.constant 0 : i32
    return %c0_i32, %c0_i32_0 : i32, i32
  }
  func.func @transform_7(%arg0: i32, %arg1: i32) -> (i32, i32) {
    %c0_i32 = arith.constant 0 : i32
    %c0_i32_0 = arith.constant 0 : i32
    %c0_i32_1 = arith.constant 0 : i32
    return %c0_i32, %c0_i32_0 : i32, i32
  }
  func.func @transform_8(%arg0: i32, %arg1: i32) -> (i32, i32, i32, i32) {
    %c0_i32 = arith.constant 0 : i32
    %c0_i32_0 = arith.constant 0 : i32
    %c0_i32_1 = arith.constant 0 : i32
    return %arg0, %arg1, %c0_i32, %c0_i32_0 : i32, i32, i32, i32
  }
}

</mosaic_0001>

<llo_original>
// kernel: tpu_custom_call.1
$region0: #{tpu_custom_call.1}
  #allocation0 [shape = 'u32[]', space=smem, size = 0x4, offset = 0x4, fixed_abs, tag = 'smem constant byte address 0x4 - core index']
  #allocation1 [shape = 'u32[144,128]{1,0:T(1,128)}', space=vmem, size = 0x12000, scoped, tag = 'internal scratch']
  #allocation2 [shape = 'bf16[16,128]{1,0:T(16,128)(2,1)}', space=vmem, size = 0x1000, scoped, tag = 'scratch operand']
  #allocation3 [shape = 'bf16[9,128]{1,0:T(8,128)(2,1)}', space=vmem, size = 0x1000, scoped, tag = 'scratch operand']
  %s0 = inlined_call_operand.hbm [shape: bf16[2,2,2,128], index: 0, kind: input, shape index: {}]
  %s1 = inlined_call_operand.hbm [shape: bf16[2,2,8,128], index: 1, kind: input, shape index: {}]
  %s2 = inlined_call_operand.hbm [shape: bf16[2,128,128], index: 2, kind: input, shape index: {}]
  %s3 = inlined_call_operand.vmem [shape: f32[1,128], index: 3, kind: input, shape index: {}]
  %s4 = inlined_call_operand.hbm [shape: bf16[2,128,128], index: 4, kind: input, shape index: {}]
  %s5 = inlined_call_operand.vmem [shape: f32[1,128], index: 5, kind: input, shape index: {}]
  %s6 = inlined_call_operand.hbm [shape: bf16[128,128], index: 6, kind: input, shape index: {}]
  %s7 = inlined_call_operand.vmem [shape: f32[1,128], index: 7, kind: input, shape index: {}]
  %s8 = inlined_call_operand.hbm [shape: f32[2,2,8,128], index: 8, kind: output, shape index: {}]
  %s9 = sld [smem:[#allocation0]]
  $region89: #{tpu_custom_call.1} parent=0
    _
  %s11 = ssub.s32 1, %s9
  %s12 = scalar_select 0, %s11, %s9
  $region1: #{tpu_custom_call.1} parent=0
    #allocation4 [shape = 'u8[1024]{0}', space=vmem, size = 0x400, scoped, tag = 'input window, operand 0']
    #allocation5 [shape = 's32[2]{0}', space=sflag, size = 0x8, scoped, tag = 'scoped memory for tpu_custom_call.1']
    #allocation6 [shape = 's32[2]{0}', space=sflag, size = 0x8, scoped, tag = 'scoped memory for tpu_custom_call.1']
    #allocation7 [shape = 'u8[4096]{0}', space=vmem, size = 0x1000, scoped, tag = 'input window, operand 1']
    #allocation8 [shape = 's32[2]{0}', space=sflag, size = 0x8, scoped, tag = 'scoped memory for tpu_custom_call.1']
    #allocation9 [shape = 'u8[65536]{0}', space=vmem, size = 0x10000, scoped, tag = 'input window, operand 2, single buffered']
    #allocation10 [shape = 'u8[65536]{0}', space=vmem, size = 0x10000, scoped, tag = 'input window, operand 4, single buffered']
    #allocation11 [shape = 's32[1]{0}', space=sflag, size = 0x4, scoped, tag = 'scoped memory for tpu_custom_call.1']
    #allocation12 [shape = 'u8[32768]{0}', space=vmem, size = 0x8000, scoped, tag = 'input window, operand 6, single buffered']
    #allocation13 [shape = 'u8[8192]{0}', space=vmem, size = 0x2000, scoped, tag = 'output window, operand 0']
    %13 = vsyncpa [#allocation5], 0
    %s14 = scalar_lea.sflag [#allocation5], 1
    %15 = vsyncpa %s14, 0
    %16 = vsyncpa [#allocation8], 0
    %s17 = scalar_lea.sflag [#allocation8], 1
    %18 = vsyncpa %s17, 0
    %19 = vsyncpa [#allocation11], 0
    %20 = vsyncpa [#allocation6], 0
    %s21 = scalar_lea.sflag [#allocation6], 1
    %22 = vsyncpa %s21, 0
    loop: start=0, step=1, limit=6
    $region2: #{tpu_custom_call.1} parent=1 // loop_pre_header
      _
    $region3: #{tpu_custom_call.1} parent=1 // loop_header
      %s24 = sphi 0, %s28
      %p25 = scmp.ge.s32.totalorder %s24, 6
      %s31 = sphi 0, %s43
      %s32 = sphi 0, %s39
      %s33 = sphi 0, %s31
      %s34 = sphi 0, %s32
      %s35 = sphi 0, %s33
      %s36 = sphi 0, %s34
      %s48 = sphi 0, %s50
      %s51 = sphi 0, %s48
      %s52 = sphi 0, %s51
      %s68 = sphi 0, %s52
      %s76 = sphi 0, %s78
      %s79 = sphi 0, %s76
      %s80 = sphi 0, %s79
      %s96 = sphi 0, %s80
      %s100 = sphi 0, %s100
      %s102 = sphi 0, %s100
      %s103 = sphi 0, %s102
      %s117 = sphi 0, %s103
      %s121 = sphi 0, %s121
      %s123 = sphi 0, %s121
      %s124 = sphi 0, %s123
      %s138 = sphi 0, %s124
      %s142 = sphi 0, %s142
      %s144 = sphi 0, %s142
      %s145 = sphi 0, %s144
      %s159 = sphi 0, %s145
      %s163 = sphi 0, %s163
      %s165 = sphi 0, %s163
      %s166 = sphi 0, %s165
      %s180 = sphi 0, %s166
      %s184 = sphi 0, %s184
      %s186 = sphi 0, %s184
      %s187 = sphi 0, %s186
      %s201 = sphi 0, %s187
      %s205 = sphi 0, %s205
      %s207 = sphi 0, %s205
      %s208 = sphi 0, %s207
      %s222 = sphi 0, %s208
      %s230 = sphi 0, %s232
      %s233 = sphi 0, %s230
      %s234 = sphi 0, %s233
      %s250 = sphi 0, %s234
    $region4: #{tpu_custom_call.1} parent=1 // loop_header_branch
      %27 = sbr.rel (%p25) target = $region8
    $region5: #{tpu_custom_call.1} parent=1 // loop_body
      %s29 = ssub.s32 %s24, 1
      %s30 = ssub.s32 %s24, 2
      %s37 = sadd.s32 1, %s32
      %p38 = scmp.ge.s32.totalorder %s37, 2
      %s39 = scalar_select %p38, 0, %s37
      %s40 = sadd.s32 1, %s31
      %s41 = scalar_select %p38, %s40, %s31
      %p42 = scmp.ge.s32.totalorder %s41, 2
      %s43 = scalar_select %p42, 0, %s41
      %s44 = ssub.s32 %s31, %s43
      %s45 = ssub.s32 %s32, %s39
      %s46 = sor.u32 %s44, %s45
      %p47 = scmp.eq.s32.totalorder %s46, 0
      %s49 = sadd.s32 %s48, 1
      %s50 = scalar_select %p47, %s48, %s49
      %p53 = pneg %p47
      %p54 = scmp.eq.s32.totalorder %s24, 3
      %p55 = por %p53, %p54
      %p56 = scmp.ne.s32.totalorder %s48, %s51
      %p57 = scmp.eq.s32.totalorder %s24, 0
      %p58 = por %p56, %p57
      %p59 = scmp.ne.s32.totalorder %s48, %s51
      %p60 = scmp.eq.s32.totalorder %s29, 3
      %p61 = por %p59, %p60
      %p62 = scmp.ne.s32.totalorder %s51, %s52
      %p63 = scmp.eq.s32.totalorder %s29, 0
      %p64 = por %p62, %p63
      %p65 = scmp.ne.s32.totalorder %s51, %s52
      %p66 = scmp.eq.s32.totalorder %s30, 3
      %p67 = por %p65, %p66
      %p69 = scmp.ne.s32.totalorder %s52, %s68
      %p70 = scmp.eq.s32.totalorder %s30, 0
      %p71 = por %p69, %p70
      %s72 = ssub.s32 %s31, %s43
      %s73 = ssub.s32 %s32, %s39
      %s74 = sor.u32 %s72, %s73
      %p75 = scmp.eq.s32.totalorder %s74, 0
      %s77 = sadd.s32 %s76, 1
      %s78 = scalar_select %p75, %s76, %s77
      %p81 = pneg %p75
      %p82 = scmp.eq.s32.totalorder %s24, 3
      %p83 = por %p81, %p82
      %p84 = scmp.ne.s32.totalorder %s76, %s79
      %p85 = scmp.eq.s32.totalorder %s24, 0
      %p86 = por %p84, %p85
      %p87 = scmp.ne.s32.totalorder %s76, %s79
      %p88 = scmp.eq.s32.totalorder %s29, 3
      %p89 = por %p87, %p88
      %p90 = scmp.ne.s32.totalorder %s79, %s80
      %p91 = scmp.eq.s32.totalorder %s29, 0
      %p92 = por %p90, %p91
      %p93 = scmp.ne.s32.totalorder %s79, %s80
      %p94 = scmp.eq.s32.totalorder %s30, 3
      %p95 = por %p93, %p94
      %p97 = scmp.ne.s32.totalorder %s80, %s96
      %p98 = scmp.eq.s32.totalorder %s30, 0
      %p99 = por %p97, %p98
      %s101 = sadd.s32 %s100, 1
      %p104 = scmp.eq.s32.totalorder %s24, 3
      %p105 = scmp.ne.s32.totalorder %s100, %s102
      %p106 = scmp.eq.s32.totalorder %s24, 0
      %p107 = por %p105, %p106
      %p108 = scmp.ne.s32.totalorder %s100, %s102
      %p109 = scmp.eq.s32.totalorder %s29, 3
      %p110 = por %p108, %p109
      %p111 = scmp.ne.s32.totalorder %s102, %s103
      %p112 = scmp.eq.s32.totalorder %s29, 0
      %p113 = por %p111, %p112
      %p114 = scmp.ne.s32.totalorder %s102, %s103
      %p115 = scmp.eq.s32.totalorder %s30, 3
      %p116 = por %p114, %p115
      %p118 = scmp.ne.s32.totalorder %s103, %s117
      %p119 = scmp.eq.s32.totalorder %s30, 0
      %p120 = por %p118, %p119
      %s122 = sadd.s32 %s121, 1
      %p125 = scmp.eq.s32.totalorder %s24, 3
      %p126 = scmp.ne.s32.totalorder %s121, %s123
      %p127 = scmp.eq.s32.totalorder %s24, 0
      %p128 = por %p126, %p127
      %p129 = scmp.ne.s32.totalorder %s121, %s123
      %p130 = scmp.eq.s32.totalorder %s29, 3
      %p131 = por %p129, %p130
      %p132 = scmp.ne.s32.totalorder %s123, %s124
      %p133 = scmp.eq.s32.totalorder %s29, 0
      %p134 = por %p132, %p133
      %p135 = scmp.ne.s32.totalorder %s123, %s124
      %p136 = scmp.eq.s32.totalorder %s30, 3
      %p137 = por %p135, %p136
      %p139 = scmp.ne.s32.totalorder %s124, %s138
      %p140 = scmp.eq.s32.totalorder %s30, 0
      %p141 = por %p139, %p140
      %s143 = sadd.s32 %s142, 1
      %p146 = scmp.eq.s32.totalorder %s24, 3
      %p147 = scmp.ne.s32.totalorder %s142, %s144
      %p148 = scmp.eq.s32.totalorder %s24, 0
      %p149 = por %p147, %p148
      %p150 = scmp.ne.s32.totalorder %s142, %s144
      %p151 = scmp.eq.s32.totalorder %s29, 3
      %p152 = por %p150, %p151
      %p153 = scmp.ne.s32.totalorder %s144, %s145
      %p154 = scmp.eq.s32.totalorder %s29, 0
      %p155 = por %p153, %p154
      %p156 = scmp.ne.s32.totalorder %s144, %s145
      %p157 = scmp.eq.s32.totalorder %s30, 3
      %p158 = por %p156, %p157
      %p160 = scmp.ne.s32.totalorder %s145, %s159
      %p161 = scmp.eq.s32.totalorder %s30, 0
      %p162 = por %p160, %p161
      %s164 = sadd.s32 %s163, 1
      %p167 = scmp.eq.s32.totalorder %s24, 3
      %p168 = scmp.ne.s32.totalorder %s163, %s165
      %p169 = scmp.eq.s32.totalorder %s24, 0
      %p170 = por %p168, %p169
      %p171 = scmp.ne.s32.totalorder %s163, %s165
      %p172 = scmp.eq.s32.totalorder %s29, 3
      %p173 = por %p171, %p172
      %p174 = scmp.ne.s32.totalorder %s165, %s166
      %p175 = scmp.eq.s32.totalorder %s29, 0
      %p176 = por %p174, %p175
      %p177 = scmp.ne.s32.totalorder %s165, %s166
      %p178 = scmp.eq.s32.totalorder %s30, 3
      %p179 = por %p177, %p178
      %p181 = scmp.ne.s32.totalorder %s166, %s180
      %p182 = scmp.eq.s32.totalorder %s30, 0
      %p183 = por %p181, %p182
      %s185 = sadd.s32 %s184, 1
      %p188 = scmp.eq.s32.totalorder %s24, 3
      %p189 = scmp.ne.s32.totalorder %s184, %s186
      %p190 = scmp.eq.s32.totalorder %s24, 0
      %p191 = por %p189, %p190
      %p192 = scmp.ne.s32.totalorder %s184, %s186
      %p193 = scmp.eq.s32.totalorder %s29, 3
      %p194 = por %p192, %p193
      %p195 = scmp.ne.s32.totalorder %s186, %s187
      %p196 = scmp.eq.s32.totalorder %s29, 0
      %p197 = por %p195, %p196
      %p198 = scmp.ne.s32.totalorder %s186, %s187
      %p199 = scmp.eq.s32.totalorder %s30, 3
      %p200 = por %p198, %p199
      %p202 = scmp.ne.s32.totalorder %s187, %s201
      %p203 = scmp.eq.s32.totalorder %s30, 0
      %p204 = por %p202, %p203
      %s206 = sadd.s32 %s205, 1
      %p209 = scmp.eq.s32.totalorder %s24, 3
      %p210 = scmp.ne.s32.totalorder %s205, %s207
      %p211 = scmp.eq.s32.totalorder %s24, 0
      %p212 = por %p210, %p211
      %p213 = scmp.ne.s32.totalorder %s205, %s207
      %p214 = scmp.eq.s32.totalorder %s29, 3
      %p215 = por %p213, %p214
      %p216 = scmp.ne.s32.totalorder %s207, %s208
      %p217 = scmp.eq.s32.totalorder %s29, 0
      %p218 = por %p216, %p217
      %p219 = scmp.ne.s32.totalorder %s207, %s208
      %p220 = scmp.eq.s32.totalorder %s30, 3
      %p221 = por %p219, %p220
      %p223 = scmp.ne.s32.totalorder %s208, %s222
      %p224 = scmp.eq.s32.totalorder %s30, 0
      %p225 = por %p223, %p224
      %s226 = ssub.s32 %s31, %s43
      %s227 = ssub.s32 %s32, %s39
      %s228 = sor.u32 %s226, %s227
      %p229 = scmp.eq.s32.totalorder %s228, 0
      %s231 = sadd.s32 %s230, 1
      %s232 = scalar_select %p229, %s230, %s231
      %p235 = pneg %p229
      %p236 = scmp.eq.s32.totalorder %s24, 3
      %p237 = por %p235, %p236
      %p238 = scmp.ne.s32.totalorder %s230, %s233
      %p239 = scmp.eq.s32.totalorder %s24, 0
      %p240 = por %p238, %p239
      %p241 = scmp.ne.s32.totalorder %s230, %s233
      %p242 = scmp.eq.s32.totalorder %s29, 3
      %p243 = por %p241, %p242
      %p244 = scmp.ne.s32.totalorder %s233, %s234
      %p245 = scmp.eq.s32.totalorder %s29, 0
      %p246 = por %p244, %p245
      %p247 = scmp.ne.s32.totalorder %s233, %s234
      %p248 = scmp.eq.s32.totalorder %s30, 3
      %p249 = por %p247, %p248
      %p251 = scmp.ne.s32.totalorder %s234, %s250
      %p252 = scmp.eq.s32.totalorder %s30, 0
      %p253 = por %p251, %p252
      %p254 = scmp.le.s32.totalorder 1, %s24
      %p255 = scmp.lt.s32.totalorder %s24, 5
      %p256 = pnand %p254, %p255
      %p257 = pneg %p256
      // Predicated region
      $region9: #{tpu_custom_call.1} parent=5 // pred_check
        _
      $region10: #{tpu_custom_call.1} parent=5 // pred_check_branch
        %259 = sbr.rel (%p256) target = $region12
      $region11: #{tpu_custom_call.1} parent=5 // pred_region
        %s260 = ssub.s32 %s24, 1
        // Predicated region
        $region13: #{tpu_custom_call.1} parent=11 // pred_check
          %p261 = pneg %p113
        $region14: #{tpu_custom_call.1} parent=11 // pred_check_branch
          %263 = sbr.rel (%p261) target = $region16
        $region15: #{tpu_custom_call.1} parent=11 // pred_region
          %s265 = ssub.s32 2048, 2048
          %266 = vsyncadd [#allocation8], %s265
          %s267 = sshll.u32 [#allocation9], 4
          %s268 = int_to_ptr.vmem [resolvable:$true] %s267
          %273 = dma.hbm_to_vmem [thread:$0]  %s2, 2048, %s268, [#allocation8], 64, 64, 4
        $region16: #{tpu_custom_call.1} parent=11 // pred_fallthru
          _
        // Predicated region
        $region17: #{tpu_custom_call.1} parent=11 // pred_check
          %p274 = pneg %p134
        $region18: #{tpu_custom_call.1} parent=11 // pred_check_branch
          %276 = sbr.rel (%p274) target = $region20
        $region19: #{tpu_custom_call.1} parent=11 // pred_region
          _
        $region20: #{tpu_custom_call.1} parent=11 // pred_fallthru
          _
        // Predicated region
        $region21: #{tpu_custom_call.1} parent=11 // pred_check
          %p277 = pneg %p155
        $region22: #{tpu_custom_call.1} parent=11 // pred_check_branch
          %279 = sbr.rel (%p277) target = $region24
        $region23: #{tpu_custom_call.1} parent=11 // pred_region
          %s281 = ssub.s32 2048, 2048
          %282 = vsyncadd [#allocation11], %s281
          %s283 = sshll.u32 [#allocation10], 4
          %s284 = int_to_ptr.vmem [resolvable:$true] %s283
          %289 = dma.hbm_to_vmem [thread:$0]  %s4, 2048, %s284, [#allocation11], 64, 64, 4
        $region24: #{tpu_custom_call.1} parent=11 // pred_fallthru
          _
        // Predicated region
        $region25: #{tpu_custom_call.1} parent=11 // pred_check
          %p290 = pneg %p176
        $region26: #{tpu_custom_call.1} parent=11 // pred_check_branch
          %292 = sbr.rel (%p290) target = $region28
        $region27: #{tpu_custom_call.1} parent=11 // pred_region
          _
        $region28: #{tpu_custom_call.1} parent=11 // pred_fallthru
          _
        // Predicated region
        $region29: #{tpu_custom_call.1} parent=11 // pred_check
          %p293 = pneg %p197
        $region30: #{tpu_custom_call.1} parent=11 // pred_check_branch
          %295 = sbr.rel (%p293) target = $region32
        $region31: #{tpu_custom_call.1} parent=11 // pred_region
          %s297 = ssub.s32 1024, 1024
          %298 = vsyncadd [#allocation11], %s297
          %s299 = sshll.u32 [#allocation12], 4
          %s300 = int_to_ptr.vmem [resolvable:$true] %s299
          %305 = dma.hbm_to_vmem [thread:$0]  %s6, 1024, %s300, [#allocation11], 64, 64, 4
        $region32: #{tpu_custom_call.1} parent=11 // pred_fallthru
          _
        // Predicated region
        $region33: #{tpu_custom_call.1} parent=11 // pred_check
          %p306 = pneg %p218
        $region34: #{tpu_custom_call.1} parent=11 // pred_check_branch
          %308 = sbr.rel (%p306) target = $region36
        $region35: #{tpu_custom_call.1} parent=11 // pred_region
          _
        $region36: #{tpu_custom_call.1} parent=11 // pred_fallthru
          _
      $region12: #{tpu_custom_call.1} parent=5 // pred_fallthru
        _
      %p309 = scmp.lt.s32.totalorder %s24, 4
      // Predicated region
      $region37: #{tpu_custom_call.1} parent=5 // pred_check
        %p310 = pneg %p309
      $region38: #{tpu_custom_call.1} parent=5 // pred_check_branch
        %312 = sbr.rel (%p310) target = $region40
      $region39: #{tpu_custom_call.1} parent=5 // pred_region
        // Predicated region
        $region41: #{tpu_custom_call.1} parent=39 // pred_check
          %p313 = pneg %p58
        $region42: #{tpu_custom_call.1} parent=39 // pred_check_branch
          %315 = sbr.rel (%p313) target = $region44
        $region43: #{tpu_custom_call.1} parent=39 // pred_region
          %s316 = sand.u32 %s48, 1
          %s317 = scalar_lea.sflag [#allocation5], %s316
          %s318 = sand.u32 %s48, 1
          %s319 = scalar_lea.vmem [#allocation4], %s318
          %s321 = ssub.s32 16, 16
          %322 = vsyncadd %s317, %s321
          %s323 = smul.addr %s31, 2
          %s324 = sadd.s32 %s32, %s323
          %s325 = smul.addr %s324, 16
          %s326 = scalar_lea.hbm %s0, %s325
          %s328 = sshll.u32 %s319, 4
          %s329 = int_to_ptr.vmem [resolvable:$true] %s328
          %331 = dma.hbm_to_vmem [thread:$0]  %s326, 16, %s329, %s317
        $region44: #{tpu_custom_call.1} parent=39 // pred_fallthru
          _
        // Predicated region
        $region45: #{tpu_custom_call.1} parent=39 // pred_check
          %p332 = pneg %p86
        $region46: #{tpu_custom_call.1} parent=39 // pred_check_branch
          %334 = sbr.rel (%p332) target = $region48
        $region47: #{tpu_custom_call.1} parent=39 // pred_region
          %s335 = sand.u32 %s24, 1
          %s336 = scalar_lea.sflag [#allocation8], %s335
          %s337 = sand.u32 %s76, 1
          %s338 = smul.addr %s337, 4
          %s339 = scalar_lea.vmem [#allocation7], %s338
          %s341 = ssub.s32 64, 64
          %342 = vsyncadd %s336, %s341
          %s343 = smul.addr %s31, 2
          %s344 = sadd.s32 %s32, %s343
          %s345 = smul.addr %s344, 64
          %s346 = scalar_lea.hbm %s1, %s345
          %s348 = sshll.u32 %s339, 4
          %s349 = int_to_ptr.vmem [resolvable:$true] %s348
          %351 = dma.hbm_to_vmem [thread:$0]  %s346, 64, %s349, %s336
        $region48: #{tpu_custom_call.1} parent=39 // pred_fallthru
          _
      $region40: #{tpu_custom_call.1} parent=5 // pred_fallthru
        _
      %p352 = scmp.le.s32.totalorder 1, %s24
      %p353 = scmp.lt.s32.totalorder %s24, 5
      %p354 = pnand %p352, %p353
      %p355 = pneg %p354
      // Predicated region
      $region49: #{tpu_custom_call.1} parent=5 // pred_check
        _
      $region50: #{tpu_custom_call.1} parent=5 // pred_check_branch
        %357 = sbr.rel (%p354) target = $region52
      $region51: #{tpu_custom_call.1} parent=5 // pred_region
        %s358 = ssub.s32 %s24, 1
        %s359 = sand.u32 %s51, 1
        %s360 = scalar_lea.sflag [#allocation5], %s359
        %s361 = sand.u32 %s51, 1
        %s362 = scalar_lea.vmem [#allocation4], %s361
        // Predicated region
        $region53: #{tpu_custom_call.1} parent=51 // pred_check
          %p363 = pneg %p64
        $region54: #{tpu_custom_call.1} parent=51 // pred_check_branch
          %365 = sbr.rel (%p363) target = $region56
        $region55: #{tpu_custom_call.1} parent=51 // pred_region
          %366 = dma.done %s360, 16
        $region56: #{tpu_custom_call.1} parent=51 // pred_fallthru
          _
        %s367 = sand.u32 %s29, 1
        %s368 = scalar_lea.sflag [#allocation8], %s367
        %s369 = sand.u32 %s79, 1
        %s370 = smul.addr %s369, 4
        %s371 = scalar_lea.vmem [#allocation7], %s370
        // Predicated region
        $region57: #{tpu_custom_call.1} parent=51 // pred_check
          %p372 = pneg %p92
        $region58: #{tpu_custom_call.1} parent=51 // pred_check_branch
          %374 = sbr.rel (%p372) target = $region60
        $region59: #{tpu_custom_call.1} parent=51 // pred_region
          %375 = dma.done %s368, 64
        $region60: #{tpu_custom_call.1} parent=51 // pred_fallthru
          _
        // Predicated region
        $region61: #{tpu_custom_call.1} parent=51 // pred_check
          %p376 = pneg %p113
        $region62: #{tpu_custom_call.1} parent=51 // pred_check_branch
          %378 = sbr.rel (%p376) target = $region64
        $region63: #{tpu_custom_call.1} parent=51 // pred_region
          %379 = dma.done [#allocation8], 2048
        $region64: #{tpu_custom_call.1} parent=51 // pred_fallthru
          _
        // Predicated region
        $region65: #{tpu_custom_call.1} parent=51 // pred_check
          %p380 = pneg %p155
        $region66: #{tpu_custom_call.1} parent=51 // pred_check_branch
          %382 = sbr.rel (%p380) target = $region68
        $region67: #{tpu_custom_call.1} parent=51 // pred_region
          %383 = dma.done [#allocation11], 2048
        $region68: #{tpu_custom_call.1} parent=51 // pred_fallthru
          _
        // Predicated region
        $region69: #{tpu_custom_call.1} parent=51 // pred_check
          %p384 = pneg %p197
        $region70: #{tpu_custom_call.1} parent=51 // pred_check_branch
          %386 = sbr.rel (%p384) target = $region72
        $region71: #{tpu_custom_call.1} parent=51 // pred_region
          %387 = dma.done [#allocation11], 1024
        $region72: #{tpu_custom_call.1} parent=51 // pred_fallthru
          _
        %s388 = sand.u32 %s51, 1
        %s389 = scalar_lea.sflag [#allocation5], %s388
        %s390 = sand.u32 %s51, 1
        %s391 = scalar_lea.vmem [#allocation4], %s390
        %p392 = pneg %p64
        %p393 = pneg %p61
        %s394 = sand.u32 %s29, 1
        %s395 = scalar_lea.sflag [#allocation8], %s394
        %s396 = sand.u32 %s79, 1
        %s397 = smul.addr %s396, 4
        %s398 = scalar_lea.vmem [#allocation7], %s397
        %p399 = pneg %p92
        %p400 = pneg %p89
        %p401 = pneg %p113
        %p402 = pneg %p110
        %p403 = pneg %p134
        %p404 = pneg %p131
        %p405 = pneg %p155
        %p406 = pneg %p152
        %p407 = pneg %p176
        %p408 = pneg %p173
        %p409 = pneg %p197
        %p410 = pneg %p194
        %p411 = pneg %p218
        %p412 = pneg %p215
        %p413 = pneg %p246
        %p414 = pneg %p243
        %s415 = sand.u32 %s233, 1
        %s416 = scalar_lea.sflag [#allocation6], %s415
        %s417 = sand.u32 %s233, 1
        %s418 = smul.addr %s417, 8
        %s419 = scalar_lea.vmem [#allocation13], %s418
        %v421 = vld [vmem:[%s362] sm:$0x1]
        %v423 = vcombine.low %v421, %v421
        %v425 = vunpack.c.l.s4 1966171168
        %v426 = vunpack.c.0.s8 %v425
        %v427 = vlaneseq
        %v428 = vshrl.u32 %v427, 7
        %v429 = vsub.s32 %v426, %v428
        %v430 = vrot.slane %v423, %v429
        %v431 = vcombine.low %v430, %v430
        %v433 = vunpack.c.l.s4 1966171168
        %v434 = vunpack.c.0.s8 %v433
        %v435 = vlaneseq
        %v436 = vshrl.u32 %v435, 7
        %v437 = vsub.s32 %v434, %v436
        %v438 = vrot.slane %v431, %v437
        %440 = vst [vmem:[#allocation2] sm:$0x8] %v438
        %v441 = vld [vmem:[%s371] sm:$0xf]
        %v443 = vunpack.c.l.b16 %v441
        %v444 = vpack.c.b16 %v443, %v443
        %446 = vst [vmem:[#allocation2] sm:$0xf0] %v444
        %v447 = vld [vmem:[#allocation2] sm:$0xf8]
        %v448 = vld [vmem:[#allocation9] sm:$0xf]
        %v449 = vld [vmem:[#allocation9 + $0x4] sm:$0xf]
        %v450 = vld [vmem:[#allocation9 + $0x8] sm:$0xf]
        %v451 = vld [vmem:[#allocation9 + $0xc] sm:$0xf]
        %v452 = vld [vmem:[#allocation9 + $0x10] sm:$0xf]
        %v453 = vld [vmem:[#allocation9 + $0x14] sm:$0xf]
        %v454 = vld [vmem:[#allocation9 + $0x18] sm:$0xf]
        %v455 = vld [vmem:[#allocation9 + $0x1c] sm:$0xf]
        %v456 = vld [vmem:[#allocation9 + $0x20] sm:$0xf]
        %v457 = vld [vmem:[#allocation9 + $0x24] sm:$0xf]
        %v458 = vld [vmem:[#allocation9 + $0x28] sm:$0xf]
        %v459 = vld [vmem:[#allocation9 + $0x2c] sm:$0xf]
        %v460 = vld [vmem:[#allocation9 + $0x30] sm:$0xf]
        %v461 = vld [vmem:[#allocation9 + $0x34] sm:$0xf]
        %v462 = vld [vmem:[#allocation9 + $0x38] sm:$0xf]
        %v463 = vld [vmem:[#allocation9 + $0x3c] sm:$0xf]
        %s464 = scalar_lea.vmem [#allocation9], 64
        %v465 = vld [vmem:[%s464] sm:$0xf]
        %v466 = vld [vmem:[%s464 + $0x4] sm:$0xf]
        %v467 = vld [vmem:[%s464 + $0x8] sm:$0xf]
        %v468 = vld [vmem:[%s464 + $0xc] sm:$0xf]
        %v469 = vld [vmem:[%s464 + $0x10] sm:$0xf]
        %v470 = vld [vmem:[%s464 + $0x14] sm:$0xf]
        %v471 = vld [vmem:[%s464 + $0x18] sm:$0xf]
        %v472 = vld [vmem:[%s464 + $0x1c] sm:$0xf]
        %v473 = vld [vmem:[%s464 + $0x20] sm:$0xf]
        %v474 = vld [vmem:[%s464 + $0x24] sm:$0xf]
        %v475 = vld [vmem:[%s464 + $0x28] sm:$0xf]
        %v476 = vld [vmem:[%s464 + $0x2c] sm:$0xf]
        %v477 = vld [vmem:[%s464 + $0x30] sm:$0xf]
        %v478 = vld [vmem:[%s464 + $0x34] sm:$0xf]
        %v479 = vld [vmem:[%s464 + $0x38] sm:$0xf]
        %v480 = vld [vmem:[%s464 + $0x3c] sm:$0xf]
        %v482 = vshrl.u32 %v447, 16
        %v484 = vrot.slane %v482, 3
        %v485 = vshll.u32 %v447, 16
        %v487 = vrot.slane %v485, 4
        %v488 = vor.u32 %v484, %v487
        %v506 = vunpack.c.l.b16 %v465
        %v507 = vunpack.c.l.b16 %v466
        %v508 = vunpack.c.l.b16 %v467
        %v509 = vunpack.c.l.b16 %v468
        %v510 = vunpack.c.l.b16 %v469
        %v511 = vunpack.c.l.b16 %v470
        %v512 = vunpack.c.l.b16 %v471
        %v513 = vunpack.c.l.b16 %v472
        %v514 = vunpack.c.l.b16 %v473
        %v515 = vunpack.c.l.b16 %v474
        %v516 = vunpack.c.l.b16 %v475
        %v517 = vunpack.c.l.b16 %v476
        %v518 = vunpack.c.l.b16 %v477
        %v519 = vunpack.c.l.b16 %v478
        %v520 = vunpack.c.l.b16 %v479
        %v521 = vunpack.c.l.b16 %v480
        %v522 = vpack.c.b16 %v507, %v506
        %v523 = vpack.c.b16 %v509, %v508
        %v524 = vpack.c.b16 %v511, %v510
        %v525 = vpack.c.b16 %v513, %v512
        %v526 = vpack.c.b16 %v515, %v514
        %v527 = vpack.c.b16 %v517, %v516
        %v528 = vpack.c.b16 %v519, %v518
        %v529 = vpack.c.b16 %v521, %v520
        %538 = vmatprep.subr.bf16.mxu0 0
        %539 = vmatpush1.bf16.msra.mxu0 %v522
        %540 = vmatprep.subr.bf16.mxu0 0
        %541 = vmatpush1.bf16.msra.mxu0 %v523
        %542 = vmatprep.subr.bf16.mxu0 0
        %543 = vmatpush1.bf16.msra.mxu0 %v524
        %544 = vmatprep.subr.bf16.mxu0 0
        %545 = vmatpush1.bf16.msra.mxu0 %v525
        %546 = vmatprep.subr.bf16.mxu0 0
        %547 = vmatpush1.bf16.msra.mxu0 %v526
        %548 = vmatprep.subr.bf16.mxu0 0
        %549 = vmatpush1.bf16.msra.mxu0 %v527
        %550 = vmatprep.subr.bf16.mxu0 0
        %551 = vmatpush1.bf16.msra.mxu0 %v528
        %552 = vmatprep.subr.bf16.mxu0 0
        %553 = vmatpush1.bf16.msra.mxu0 %v529
        %554 = vmatprep.subr.bf16.mxu0 0
        %555 = vmatpush1.bf16.msra.mxu0 0
        %556 = vmatprep.subr.bf16.mxu0 0
        %557 = vmatpush1.bf16.msra.mxu0 0
        %558 = vmatprep.subr.bf16.mxu0 0
        %559 = vmatpush1.bf16.msra.mxu0 0
        %560 = vmatprep.subr.bf16.mxu0 0
        %561 = vmatpush1.bf16.msra.mxu0 0
        %562 = vmatprep.subr.bf16.mxu0 0
        %563 = vmatpush1.bf16.msra.mxu0 0
        %564 = vmatprep.subr.bf16.mxu0 0
        %565 = vmatpush1.bf16.msra.mxu0 0
        %566 = vmatprep.subr.bf16.mxu0 0
        %567 = vmatpush1.bf16.msra.mxu0 0
        %568 = vmatprep.subr.bf16.mxu0 0
        %569 = vmatpush1.bf16.msra.mxu0 0
        %570 = vmatprep.mubr.bf16.mxu0 0
        %571 = vmatmul.mubr.bf16.gmra.mrb[0].mxu0 %v488
        %v572 = vpop.f32.mrb[0].mxu0
        %v573 = vadd.f32 0.0, %v572
        %v574 = vpop.f32.mrb[0].mxu0
        %v575 = vpop.f32.mrb[0].mxu0
        %v576 = vadd.f32 0.0, %v575
        %v577 = vpop.f32.mrb[0].mxu0
        %578 = vdwg.mxu0
        %v580 = vrot.slane %v447, 3
        %v598 = vunpack.c.l.b16 %v448
        %v599 = vunpack.c.l.b16 %v449
        %v600 = vunpack.c.l.b16 %v450
        %v601 = vunpack.c.l.b16 %v451
        %v602 = vunpack.c.l.b16 %v452
        %v603 = vunpack.c.l.b16 %v453
        %v604 = vunpack.c.l.b16 %v454
        %v605 = vunpack.c.l.b16 %v455
        %v606 = vunpack.c.l.b16 %v456
        %v607 = vunpack.c.l.b16 %v457
        %v608 = vunpack.c.l.b16 %v458
        %v609 = vunpack.c.l.b16 %v459
        %v610 = vunpack.c.l.b16 %v460
        %v611 = vunpack.c.l.b16 %v461
        %v612 = vunpack.c.l.b16 %v462
        %v613 = vunpack.c.l.b16 %v463
        %v614 = vpack.c.b16 %v599, %v598
        %v615 = vpack.c.b16 %v601, %v600
        %v616 = vpack.c.b16 %v603, %v602
        %v617 = vpack.c.b16 %v605, %v604
        %v618 = vpack.c.b16 %v607, %v606
        %v619 = vpack.c.b16 %v609, %v608
        %v620 = vpack.c.b16 %v611, %v610
        %v621 = vpack.c.b16 %v613, %v612
        %630 = vmatprep.subr.bf16.mxu0 0
        %631 = vmatpush1.bf16.msra.mxu0 %v614
        %632 = vmatprep.subr.bf16.mxu0 0
        %633 = vmatpush1.bf16.msra.mxu0 %v615
        %634 = vmatprep.subr.bf16.mxu0 0
        %635 = vmatpush1.bf16.msra.mxu0 %v616
        %636 = vmatprep.subr.bf16.mxu0 0
        %637 = vmatpush1.bf16.msra.mxu0 %v617
        %638 = vmatprep.subr.bf16.mxu0 0
        %639 = vmatpush1.bf16.msra.mxu0 %v618
        %640 = vmatprep.subr.bf16.mxu0 0
        %641 = vmatpush1.bf16.msra.mxu0 %v619
        %642 = vmatprep.subr.bf16.mxu0 0
        %643 = vmatpush1.bf16.msra.mxu0 %v620
        %644 = vmatprep.subr.bf16.mxu0 0
        %645 = vmatpush1.bf16.msra.mxu0 %v621
        %646 = vmatprep.subr.bf16.mxu0 0
        %647 = vmatpush1.bf16.msra.mxu0 0
        %648 = vmatprep.subr.bf16.mxu0 0
        %649 = vmatpush1.bf16.msra.mxu0 0
        %650 = vmatprep.subr.bf16.mxu0 0
        %651 = vmatpush1.bf16.msra.mxu0 0
        %652 = vmatprep.subr.bf16.mxu0 0
        %653 = vmatpush1.bf16.msra.mxu0 0
        %654 = vmatprep.subr.bf16.mxu0 0
        %655 = vmatpush1.bf16.msra.mxu0 0
        %656 = vmatprep.subr.bf16.mxu0 0
        %657 = vmatpush1.bf16.msra.mxu0 0
        %658 = vmatprep.subr.bf16.mxu0 0
        %659 = vmatpush1.bf16.msra.mxu0 0
        %660 = vmatprep.subr.bf16.mxu0 0
        %661 = vmatpush1.bf16.msra.mxu0 0
        %662 = vmatprep.mubr.bf16.mxu0 0
        %663 = vmatmul.mubr.bf16.gmra.mrb[0].mxu0 %v580
        %v664 = vpop.f32.mrb[0].mxu0
        %v665 = vadd.f32 %v573, %v664
        %v666 = vpop.f32.mrb[0].mxu0
        %v667 = vpop.f32.mrb[0].mxu0
        %v668 = vadd.f32 %v576, %v667
        %v669 = vpop.f32.mrb[0].mxu0
        %670 = vdwg.mxu0
        %v671 = vld [vmem:[%s3] sm:$0x1]
        %v673 = vlaneseq
        %v674 = vshrl.u32 %v673, 7
        %v675 = vsub.s32 0, %v674
        %v676 = vrot.slane %v671, %v675
        %v678 = vadd.f32 %v665, %v676
        %v679 = vadd.f32 %v668, %v676
        %v680 = vmax.f32 %v678, 0.0
        %v681 = vmax.f32 %v679, 0.0
        %v682 = vpack.c.bf16 %v681, %v680
        %v684 = vunpack.c.l.b16 %v682
        %v685 = vunpack.c.h.b16 %v682
        %v686 = vpack.c.b16 %v684, %v684
        %v687 = vpack.c.b16 %v685, %v685
        %690 = vst [vmem:[#allocation3] sm:$0xf] %v686
        %vm691 = vcmask 1040384
        %vm692 = vsmask.f32 256
        %vm693 = vmand %vm691, %vm692
        %v694 = vld [vmem:[#allocation3 + $0x4] sm:$0x1]
        %v695 = vsel %vm693, %v687, %v694
        %696 = vst [vmem:[#allocation3 + $0x4] sm:$0x1] %v695
        %p697 = scmp.eq.s32.totalorder %s34, 0
        // Predicated region
        $region73: #{tpu_custom_call.1} parent=51 // pred_check
          %p698 = pneg %p697
        $region74: #{tpu_custom_call.1} parent=51 // pred_check_branch
          %700 = sbr.rel (%p698) target = $region76
        $region75: #{tpu_custom_call.1} parent=51 // pred_region
          %v701 = vld [vmem:[#allocation3] sm:$0x1]
          %v702 = vsel %vm693, 0, %v701
          %703 = vst [vmem:[#allocation3] sm:$0x1] %v702
        $region76: #{tpu_custom_call.1} parent=51 // pred_fallthru
          _
        %v704 = vld [vmem:[#allocation3] sm:$0xf]
        %v705 = vld [vmem:[#allocation10] sm:$0xf]
        %v706 = vld [vmem:[#allocation10 + $0x4] sm:$0xf]
        %v707 = vld [vmem:[#allocation10 + $0x8] sm:$0xf]
        %v708 = vld [vmem:[#allocation10 + $0xc] sm:$0xf]
        %v709 = vld [vmem:[#allocation10 + $0x10] sm:$0xf]
        %v710 = vld [vmem:[#allocation10 + $0x14] sm:$0xf]
        %v711 = vld [vmem:[#allocation10 + $0x18] sm:$0xf]
        %v712 = vld [vmem:[#allocation10 + $0x1c] sm:$0xf]
        %v713 = vld [vmem:[#allocation10 + $0x20] sm:$0xf]
        %v714 = vld [vmem:[#allocation10 + $0x24] sm:$0xf]
        %v715 = vld [vmem:[#allocation10 + $0x28] sm:$0xf]
        %v716 = vld [vmem:[#allocation10 + $0x2c] sm:$0xf]
        %v717 = vld [vmem:[#allocation10 + $0x30] sm:$0xf]
        %v718 = vld [vmem:[#allocation10 + $0x34] sm:$0xf]
        %v719 = vld [vmem:[#allocation10 + $0x38] sm:$0xf]
        %v720 = vld [vmem:[#allocation10 + $0x3c] sm:$0xf]
        %v721 = vld [vmem:[#allocation3 + $0x4] sm:$0x1]
        %s722 = scalar_lea.vmem [#allocation10], 64
        %v723 = vld [vmem:[%s722] sm:$0xf]
        %v724 = vld [vmem:[%s722 + $0x4] sm:$0xf]
        %v725 = vld [vmem:[%s722 + $0x8] sm:$0xf]
        %v726 = vld [vmem:[%s722 + $0xc] sm:$0xf]
        %v727 = vld [vmem:[%s722 + $0x10] sm:$0xf]
        %v728 = vld [vmem:[%s722 + $0x14] sm:$0xf]
        %v729 = vld [vmem:[%s722 + $0x18] sm:$0xf]
        %v730 = vld [vmem:[%s722 + $0x1c] sm:$0xf]
        %v731 = vld [vmem:[%s722 + $0x20] sm:$0xf]
        %v732 = vld [vmem:[%s722 + $0x24] sm:$0xf]
        %v733 = vld [vmem:[%s722 + $0x28] sm:$0xf]
        %v734 = vld [vmem:[%s722 + $0x2c] sm:$0xf]
        %v735 = vld [vmem:[%s722 + $0x30] sm:$0xf]
        %v736 = vld [vmem:[%s722 + $0x34] sm:$0xf]
        %v737 = vld [vmem:[%s722 + $0x38] sm:$0xf]
        %v738 = vld [vmem:[%s722 + $0x3c] sm:$0xf]
        %v741 = vunpack.c.l.b16 %v704
        %v742 = vunpack.c.l.b16 %v721
        %v743 = vpack.c.b16 %v742, %v741
        %v745 = vshrl.u32 %v743, 16
        %v747 = vshll.u32 %v743, 16
        %v749 = vrot.slane %v747, 1
        %v750 = vor.u32 %v745, %v749
        %v768 = vunpack.c.l.b16 %v723
        %v769 = vunpack.c.l.b16 %v724
        %v770 = vunpack.c.l.b16 %v725
        %v771 = vunpack.c.l.b16 %v726
        %v772 = vunpack.c.l.b16 %v727
        %v773 = vunpack.c.l.b16 %v728
        %v774 = vunpack.c.l.b16 %v729
        %v775 = vunpack.c.l.b16 %v730
        %v776 = vunpack.c.l.b16 %v731
        %v777 = vunpack.c.l.b16 %v732
        %v778 = vunpack.c.l.b16 %v733
        %v779 = vunpack.c.l.b16 %v734
        %v780 = vunpack.c.l.b16 %v735
        %v781 = vunpack.c.l.b16 %v736
        %v782 = vunpack.c.l.b16 %v737
        %v783 = vunpack.c.l.b16 %v738
        %v784 = vpack.c.b16 %v769, %v768
        %v785 = vpack.c.b16 %v771, %v770
        %v786 = vpack.c.b16 %v773, %v772
        %v787 = vpack.c.b16 %v775, %v774
        %v788 = vpack.c.b16 %v777, %v776
        %v789 = vpack.c.b16 %v779, %v778
        %v790 = vpack.c.b16 %v781, %v780
        %v791 = vpack.c.b16 %v783, %v782
        %800 = vmatprep.subr.bf16.mxu0 0
        %801 = vmatpush1.bf16.msra.mxu0 %v784
        %802 = vmatprep.subr.bf16.mxu0 0
        %803 = vmatpush1.bf16.msra.mxu0 %v785
        %804 = vmatprep.subr.bf16.mxu0 0
        %805 = vmatpush1.bf16.msra.mxu0 %v786
        %806 = vmatprep.subr.bf16.mxu0 0
        %807 = vmatpush1.bf16.msra.mxu0 %v787
        %808 = vmatprep.subr.bf16.mxu0 0
        %809 = vmatpush1.bf16.msra.mxu0 %v788
        %810 = vmatprep.subr.bf16.mxu0 0
        %811 = vmatpush1.bf16.msra.mxu0 %v789
        %812 = vmatprep.subr.bf16.mxu0 0
        %813 = vmatpush1.bf16.msra.mxu0 %v790
        %814 = vmatprep.subr.bf16.mxu0 0
        %815 = vmatpush1.bf16.msra.mxu0 %v791
        %816 = vmatprep.subr.bf16.mxu0 0
        %817 = vmatpush1.bf16.msra.mxu0 0
        %818 = vmatprep.subr.bf16.mxu0 0
        %819 = vmatpush1.bf16.msra.mxu0 0
        %820 = vmatprep.subr.bf16.mxu0 0
        %821 = vmatpush1.bf16.msra.mxu0 0
        %822 = vmatprep.subr.bf16.mxu0 0
        %823 = vmatpush1.bf16.msra.mxu0 0
        %824 = vmatprep.subr.bf16.mxu0 0
        %825 = vmatpush1.bf16.msra.mxu0 0
        %826 = vmatprep.subr.bf16.mxu0 0
        %827 = vmatpush1.bf16.msra.mxu0 0
        %828 = vmatprep.subr.bf16.mxu0 0
        %829 = vmatpush1.bf16.msra.mxu0 0
        %830 = vmatprep.subr.bf16.mxu0 0
        %831 = vmatpush1.bf16.msra.mxu0 0
        %832 = vmatprep.mubr.bf16.mxu0 0
        %833 = vmatmul.mubr.bf16.gmra.mrb[0].mxu0 %v750
        %v834 = vpop.f32.mrb[0].mxu0
        %v835 = vadd.f32 0.0, %v834
        %v836 = vpop.f32.mrb[0].mxu0
        %v837 = vpop.f32.mrb[0].mxu0
        %v838 = vpop.f32.mrb[0].mxu0
        %839 = vdwg.mxu0
        %v856 = vunpack.c.l.b16 %v705
        %v857 = vunpack.c.l.b16 %v706
        %v858 = vunpack.c.l.b16 %v707
        %v859 = vunpack.c.l.b16 %v708
        %v860 = vunpack.c.l.b16 %v709
        %v861 = vunpack.c.l.b16 %v710
        %v862 = vunpack.c.l.b16 %v711
        %v863 = vunpack.c.l.b16 %v712
        %v864 = vunpack.c.l.b16 %v713
        %v865 = vunpack.c.l.b16 %v714
        %v866 = vunpack.c.l.b16 %v715
        %v867 = vunpack.c.l.b16 %v716
        %v868 = vunpack.c.l.b16 %v717
        %v869 = vunpack.c.l.b16 %v718
        %v870 = vunpack.c.l.b16 %v719
        %v871 = vunpack.c.l.b16 %v720
        %v872 = vpack.c.b16 %v857, %v856
        %v873 = vpack.c.b16 %v859, %v858
        %v874 = vpack.c.b16 %v861, %v860
        %v875 = vpack.c.b16 %v863, %v862
        %v876 = vpack.c.b16 %v865, %v864
        %v877 = vpack.c.b16 %v867, %v866
        %v878 = vpack.c.b16 %v869, %v868
        %v879 = vpack.c.b16 %v871, %v870
        %888 = vmatprep.subr.bf16.mxu0 0
        %889 = vmatpush1.bf16.msra.mxu0 %v872
        %890 = vmatprep.subr.bf16.mxu0 0
        %891 = vmatpush1.bf16.msra.mxu0 %v873
        %892 = vmatprep.subr.bf16.mxu0 0
        %893 = vmatpush1.bf16.msra.mxu0 %v874
        %894 = vmatprep.subr.bf16.mxu0 0
        %895 = vmatpush1.bf16.msra.mxu0 %v875
        %896 = vmatprep.subr.bf16.mxu0 0
        %897 = vmatpush1.bf16.msra.mxu0 %v876
        %898 = vmatprep.subr.bf16.mxu0 0
        %899 = vmatpush1.bf16.msra.mxu0 %v877
        %900 = vmatprep.subr.bf16.mxu0 0
        %901 = vmatpush1.bf16.msra.mxu0 %v878
        %902 = vmatprep.subr.bf16.mxu0 0
        %903 = vmatpush1.bf16.msra.mxu0 %v879
        %904 = vmatprep.subr.bf16.mxu0 0
        %905 = vmatpush1.bf16.msra.mxu0 0
        %906 = vmatprep.subr.bf16.mxu0 0
        %907 = vmatpush1.bf16.msra.mxu0 0
        %908 = vmatprep.subr.bf16.mxu0 0
        %909 = vmatpush1.bf16.msra.mxu0 0
        %910 = vmatprep.subr.bf16.mxu0 0
        %911 = vmatpush1.bf16.msra.mxu0 0
        %912 = vmatprep.subr.bf16.mxu0 0
        %913 = vmatpush1.bf16.msra.mxu0 0
        %914 = vmatprep.subr.bf16.mxu0 0
        %915 = vmatpush1.bf16.msra.mxu0 0
        %916 = vmatprep.subr.bf16.mxu0 0
        %917 = vmatpush1.bf16.msra.mxu0 0
        %918 = vmatprep.subr.bf16.mxu0 0
        %919 = vmatpush1.bf16.msra.mxu0 0
        %920 = vmatprep.mubr.bf16.mxu0 0
        %921 = vmatmul.mubr.bf16.gmra.mrb[0].mxu0 %v704
        %v922 = vpop.f32.mrb[0].mxu0
        %v923 = vadd.f32 %v835, %v922
        %v924 = vpop.f32.mrb[0].mxu0
        %v925 = vpop.f32.mrb[0].mxu0
        %v926 = vpop.f32.mrb[0].mxu0
        %927 = vdwg.mxu0
        %v928 = vld [vmem:[%s5] sm:$0x1]
        %v930 = vlaneseq
        %v931 = vshrl.u32 %v930, 7
        %v932 = vsub.s32 0, %v931
        %v933 = vrot.slane %v928, %v932
        %v935 = vadd.f32 %v923, %v933
        %v936 = vmax.f32 %v935, 0.0
        %v937 = vld [vmem:[%s371] sm:$0xf]
        %v938 = vld [vmem:[#allocation12] sm:$0xf]
        %v939 = vld [vmem:[#allocation12 + $0x4] sm:$0xf]
        %v940 = vld [vmem:[#allocation12 + $0x8] sm:$0xf]
        %v941 = vld [vmem:[#allocation12 + $0xc] sm:$0xf]
        %v942 = vld [vmem:[#allocation12 + $0x10] sm:$0xf]
        %v943 = vld [vmem:[#allocation12 + $0x14] sm:$0xf]
        %v944 = vld [vmem:[#allocation12 + $0x18] sm:$0xf]
        %v945 = vld [vmem:[#allocation12 + $0x1c] sm:$0xf]
        %v946 = vld [vmem:[#allocation12 + $0x20] sm:$0xf]
        %v947 = vld [vmem:[#allocation12 + $0x24] sm:$0xf]
        %v948 = vld [vmem:[#allocation12 + $0x28] sm:$0xf]
        %v949 = vld [vmem:[#allocation12 + $0x2c] sm:$0xf]
        %v950 = vld [vmem:[#allocation12 + $0x30] sm:$0xf]
        %v951 = vld [vmem:[#allocation12 + $0x34] sm:$0xf]
        %v952 = vld [vmem:[#allocation12 + $0x38] sm:$0xf]
        %v953 = vld [vmem:[#allocation12 + $0x3c] sm:$0xf]
        %v954 = vld [vmem:[%s7] sm:$0x1]
        %v956 = vlaneseq
        %v957 = vshrl.u32 %v956, 7
        %v958 = vsub.s32 0, %v957
        %v959 = vrot.slane %v954, %v958
        %v977 = vunpack.c.l.b16 %v938
        %v978 = vunpack.c.l.b16 %v939
        %v979 = vunpack.c.l.b16 %v940
        %v980 = vunpack.c.l.b16 %v941
        %v981 = vunpack.c.l.b16 %v942
        %v982 = vunpack.c.l.b16 %v943
        %v983 = vunpack.c.l.b16 %v944
        %v984 = vunpack.c.l.b16 %v945
        %v985 = vunpack.c.l.b16 %v946
        %v986 = vunpack.c.l.b16 %v947
        %v987 = vunpack.c.l.b16 %v948
        %v988 = vunpack.c.l.b16 %v949
        %v989 = vunpack.c.l.b16 %v950
        %v990 = vunpack.c.l.b16 %v951
        %v991 = vunpack.c.l.b16 %v952
        %v992 = vunpack.c.l.b16 %v953
        %v993 = vpack.c.b16 %v978, %v977
        %v994 = vpack.c.b16 %v980, %v979
        %v995 = vpack.c.b16 %v982, %v981
        %v996 = vpack.c.b16 %v984, %v983
        %v997 = vpack.c.b16 %v986, %v985
        %v998 = vpack.c.b16 %v988, %v987
        %v999 = vpack.c.b16 %v990, %v989
        %v1000 = vpack.c.b16 %v992, %v991
        %1009 = vmatprep.subr.bf16.mxu0 0
        %1010 = vmatpush1.bf16.msra.mxu0 %v993
        %1011 = vmatprep.subr.bf16.mxu0 0
        %1012 = vmatpush1.bf16.msra.mxu0 %v994
        %1013 = vmatprep.subr.bf16.mxu0 0
        %1014 = vmatpush1.bf16.msra.mxu0 %v995
        %1015 = vmatprep.subr.bf16.mxu0 0
        %1016 = vmatpush1.bf16.msra.mxu0 %v996
        %1017 = vmatprep.subr.bf16.mxu0 0
        %1018 = vmatpush1.bf16.msra.mxu0 %v997
        %1019 = vmatprep.subr.bf16.mxu0 0
        %1020 = vmatpush1.bf16.msra.mxu0 %v998
        %1021 = vmatprep.subr.bf16.mxu0 0
        %1022 = vmatpush1.bf16.msra.mxu0 %v999
        %1023 = vmatprep.subr.bf16.mxu0 0
        %1024 = vmatpush1.bf16.msra.mxu0 %v1000
        %1025 = vmatprep.subr.bf16.mxu0 0
        %1026 = vmatpush1.bf16.msra.mxu0 0
        %1027 = vmatprep.subr.bf16.mxu0 0
        %1028 = vmatpush1.bf16.msra.mxu0 0
        %1029 = vmatprep.subr.bf16.mxu0 0
        %1030 = vmatpush1.bf16.msra.mxu0 0
        %1031 = vmatprep.subr.bf16.mxu0 0
        %1032 = vmatpush1.bf16.msra.mxu0 0
        %1033 = vmatprep.subr.bf16.mxu0 0
        %1034 = vmatpush1.bf16.msra.mxu0 0
        %1035 = vmatprep.subr.bf16.mxu0 0
        %1036 = vmatpush1.bf16.msra.mxu0 0
        %1037 = vmatprep.subr.bf16.mxu0 0
        %1038 = vmatpush1.bf16.msra.mxu0 0
        %1039 = vmatprep.subr.bf16.mxu0 0
        %1040 = vmatpush1.bf16.msra.mxu0 0
        %1041 = vmatprep.mubr.bf16.mxu0 0
        %1042 = vmatmul.mubr.bf16.gmra.mrb[0].mxu0 %v937
        %v1043 = vpop.f32.mrb[0].mxu0
        %v1044 = vadd.f32 %v959, %v1043
        %v1045 = vpop.f32.mrb[0].mxu0
        %v1046 = vpop.f32.mrb[0].mxu0
        %v1047 = vpop.f32.mrb[0].mxu0
        %1048 = vdwg.mxu0
        %v1049 = vadd.f32 %v936, %v1044
        %v1050 = vmax.f32 %v1049, 0.0
        %1051 = vst [vmem:[%s419] sm:$0xff] %v1050
        %s1052 = sand.u32 %s233, 1
        %s1053 = scalar_lea.sflag [#allocation6], %s1052
        %s1054 = sand.u32 %s233, 1
        %s1055 = smul.addr %s1054, 8
        %s1056 = scalar_lea.vmem [#allocation13], %s1055
        // Predicated region
        $region77: #{tpu_custom_call.1} parent=51 // pred_check
          %p1057 = pneg %p243
        $region78: #{tpu_custom_call.1} parent=51 // pred_check_branch
          %1059 = sbr.rel (%p1057) target = $region80
        $region79: #{tpu_custom_call.1} parent=51 // pred_region
          %s1061 = ssub.s32 128, 128
          %1062 = vsyncadd %s1053, %s1061
          %s1063 = smul.addr %s33, 2
          %s1064 = sadd.s32 %s34, %s1063
          %s1065 = smul.addr %s1064, 128
          %s1066 = scalar_lea.hbm %s8, %s1065
          %s1068 = sshll.u32 %s1056, 4
          %s1069 = int_to_ptr.vmem [resolvable:$true] %s1068
          %1071 = dma.vmem_to_hbm [thread:$0]  %s1069, 128, %s1066, %s1053
        $region80: #{tpu_custom_call.1} parent=51 // pred_fallthru
          _
      $region52: #{tpu_custom_call.1} parent=5 // pred_fallthru
        _
      %p1072 = scmp.le.s32.totalorder 2, %s24
      // Predicated region
      $region81: #{tpu_custom_call.1} parent=5 // pred_check
        %p1073 = pneg %p1072
      $region82: #{tpu_custom_call.1} parent=5 // pred_check_branch
        %1075 = sbr.rel (%p1073) target = $region84
      $region83: #{tpu_custom_call.1} parent=5 // pred_region
        %s1076 = ssub.s32 %s24, 2
        // Predicated region
        $region85: #{tpu_custom_call.1} parent=83 // pred_check
          %p1077 = pneg %p249
        $region86: #{tpu_custom_call.1} parent=83 // pred_check_branch
          %1079 = sbr.rel (%p1077) target = $region88
        $region87: #{tpu_custom_call.1} parent=83 // pred_region
          %s1080 = sand.u32 %s234, 1
          %s1081 = scalar_lea.sflag [#allocation6], %s1080
          %s1082 = sand.u32 %s234, 1
          %s1083 = smul.addr %s1082, 8
          %s1084 = scalar_lea.vmem [#allocation13], %s1083
          %1085 = dma.done %s1081, 128
        $region88: #{tpu_custom_call.1} parent=83 // pred_fallthru
          _
      $region84: #{tpu_custom_call.1} parent=5 // pred_fallthru
        _
    $region6: #{tpu_custom_call.1} parent=1 // loop_footer
      %s28 = sadd.s32 1, %s24
    $region7: #{tpu_custom_call.1} parent=1 // loop_footer_branch
      %23 = sbr.rel target = $region3
    $region8: #{tpu_custom_call.1} parent=1 // loop_exit
      _
    %1086 = vsyncpa [#allocation5], 1
    %s1087 = scalar_lea.sflag [#allocation5], 1
    %1088 = vsyncpa %s1087, 1
    %1089 = vsyncpa [#allocation8], 1
    %s1090 = scalar_lea.sflag [#allocation8], 1
    %1091 = vsyncpa %s1090, 1
    %1092 = vsyncpa [#allocation11], 1
    %1093 = vsyncpa [#allocation6], 1
    %s1094 = scalar_lea.sflag [#allocation6], 1
    %1095 = vsyncpa %s1094, 1

</llo_original>
